<compile_context>
chip_gen: v6e
topology: v6e:2x2x1
jax: 0.10.0
libtpu: 0.0.40
codegen_flags: <defaults>
</compile_context>

<pallas_src>
import math

import jax
import jax.numpy as jnp
from jax import lax
from jax.experimental import pallas as pl
from jax.experimental.pallas import tpu as pltpu


# Steady-state VMEM for one grid step: 2x input + 2x output block buffers
# (x dtype) plus one PE scratch.  Kept <= ~20 MiB so it fits the 32 MiB scoped
# limit on every generation (incl. v7x's 64 MiB physical VMEM) with headroom.
_VMEM_TILE_BUDGET_BYTES = 20 * 1024 * 1024
# Only split a whole-sequence tile in two (for v7x's 2 TCs) if each half still
# moves at least this much HBM traffic (read + write) per block.
_SPLIT_TRAFFIC_FLOOR_BYTES = 2 * 1024 * 1024
# When folding batch elements into one block, target this much traffic/block.
_FOLD_TRAFFIC_TARGET_BYTES = 4 * 1024 * 1024


def _choose_tiling(N, L, D, x_dtype, pe_dtype):
    """Returns (seq_tile, batch_block)."""
    itemsize = jnp.dtype(x_dtype).itemsize
    pe_itemsize = jnp.dtype(pe_dtype).itemsize
    # Sublane multiple including the dtype packing factor: 8 f32, 16 bf16, 32 int8.
    sub = 8 * max(4 // max(itemsize, 1), 1)

    # Tallest sequence tile (one batch element / block) under the VMEM budget.
    per_row = D * (4 * itemsize + pe_itemsize)   # 2*in + 2*out + PE scratch
    tl = max(_VMEM_TILE_BUDGET_BYTES // max(per_row, 1), sub)

    if tl < L:
        # Partial tiling of L; sublane-aligned; no batch folding needed
        # (blocks are already VMEM-budget sized).
        return max((tl // sub) * sub, sub), 1

    # Whole sequence fits in one tile.
    half = -(-L // 2)                 # ceil(L / 2)
    half = -(-half // sub) * sub      # round up to the sublane multiple
    if half < L and 2 * half * D * itemsize >= _SPLIT_TRAFFIC_FLOOR_BYTES:
        # Keep exactly 2 L-tiles so both v7x TensorCores get work on the
        # "parallel" axis while each block stays >= ~2 MiB of traffic.
        return half, 1

    # Short sequence: fold batch elements into one block to amortize the fixed
    # per-grid-step cost.
    row_bytes = L * D * itemsize
    b_budget = max(
        (_VMEM_TILE_BUDGET_BYTES - L * D * pe_itemsize) // max(4 * row_bytes, 1), 1)
    b_traffic = max(_FOLD_TRAFFIC_TARGET_BYTES // max(2 * row_bytes, 1), 1)
    b_blk = int(min(N, b_budget, b_traffic))
    return L, max(b_blk, 1)


def _pe_add_kernel(x_ref, o_ref, pe_ref):
    """x_ref/o_ref: (B_blk, TL, D) block; pe_ref: (TL, D) scratch (PE dtype)."""
    TL, D = pe_ref.shape

    # COMPILE FIX: read the grid position at the TOP LEVEL of the kernel (not
    # inside the pl.when body) so no program_id primitive is left inside the
    # cond branch.
    l0 = pl.program_id(0) * TL                 # absolute first row of this L-tile
    first_batch_block = pl.program_id(1) == 0  # batch axis is innermost

    # Build the PE tile once per L-tile (on the first batch block) and reuse
    # it for the remaining batch blocks.  Correct because the batch axis is
    # innermost and marked "arbitrary".
    @pl.when(first_batch_block)
    def _():
        # Frequencies depend only on the channel index: D transcendentals on a
        # (1, D) row instead of TL*D.
        ch = lax.broadcasted_iota(jnp.int32, (1, D), 1)                  # (1, D)
        is_odd = (ch % 2).astype(jnp.float32)
        ch_even = (ch - (ch % 2)).astype(jnp.float32)
        freq = jnp.exp(ch_even * (-(math.log(10000.0) / float(D))))      # (1, D)

        pos = (l0 + lax.broadcasted_iota(jnp.int32, (TL, 1), 0)
               ).astype(jnp.float32)                                     # (TL, 1)

        # cos(x) == sin(x + pi/2): fold the even/odd select into a phase shift
        # so each element costs a single transcendental.
        angle = pos * freq + is_odd * (math.pi / 2.0)                    # (TL, D)
        pe_ref[...] = jnp.sin(angle).astype(pe_ref.dtype)

    x = x_ref[...]
    pe = pe_ref[...]  # (TL, D) broadcasts against (B_blk, TL, D)
    if x.dtype == pe.dtype:
        # Native-dtype add: f32/f32 or bf16/bf16 (bf16 VALU on v6e/v7x).
        o_ref[...] = (x + pe).astype(o_ref.dtype)
    else:
        # Fallback: f32 compute, single cast on the store.
        o_ref[...] = (x.astype(jnp.float32) + pe.astype(jnp.float32)
                      ).astype(o_ref.dtype)


def sinusoidal_positional_encoding(x, *, seq_tile=None, batch_block=None):
    """x: (N, L, D). Returns x + PE(L, D) broadcast over batch (same dtype)."""
    N, L, D = x.shape
    if D % 2 != 0:
        raise ValueError(
            "Cannot use sin/cos positional encoding with odd dim (got dim=%d)" % D)

    xdt = jnp.dtype(x.dtype)
    # bf16 scratch + bf16 add on bf16 inputs; f32 otherwise.
    if xdt in (jnp.dtype(jnp.float32), jnp.dtype(jnp.bfloat16)):
        pe_dtype = xdt
    else:
        pe_dtype = jnp.dtype(jnp.float32)

    tl, b_blk = _choose_tiling(N, L, D, xdt, pe_dtype)
    if seq_tile is not None:
        tl = min(int(seq_tile), L)
    if batch_block is not None:
        b_blk = min(int(batch_block), N)

    n_l_tiles = pl.cdiv(L, tl)
    n_b_tiles = pl.cdiv(N, b_blk)

    return pl.pallas_call(
        _pe_add_kernel,
        out_shape=jax.ShapeDtypeStruct((N, L, D), x.dtype),
        grid_spec=pltpu.PrefetchScalarGridSpec(
            num_scalar_prefetch=0,
            # L-tiles outer ("parallel": megacore/v7x splits sequence tiles),
            # batch innermost ("arbitrary": PE scratch reused across it).
            grid=(n_l_tiles, n_b_tiles),
            in_specs=[pl.BlockSpec((b_blk, tl, D), lambda l, b: (b, l, 0))],
            out_specs=pl.BlockSpec((b_blk, tl, D), lambda l, b: (b, l, 0)),
            scratch_shapes=[pltpu.VMEM((tl, D), pe_dtype)],
        ),
        compiler_params=pltpu.CompilerParams(
            dimension_semantics=("parallel", "arbitrary"),
            vmem_limit_bytes=32 * 1024 * 1024,
        ),
        # Pure in-place add: alias the input buffer to the output.
        input_output_aliases={0: 0},
    )(x)


def _reference(x):
    """Pure-JAX reference mirroring the PyTorch module."""
    N, L, D = x.shape
    position = jnp.arange(L, dtype=jnp.float32)[:, None]                 # (L, 1)
    div_term = jnp.exp(
        jnp.arange(0, D, 2, dtype=jnp.float32) * -(math.log(10000.0) / D))
    pe = jnp.zeros((L, D), dtype=jnp.float32)
    pe = pe.at[:, 0::2].set(jnp.sin(position * div_term))
    pe = pe.at[:, 1::2].set(jnp.cos(position * div_term))
    return x + pe[None].astype(x.dtype)


if __name__ == "__main__":
    key = jax.random.PRNGKey(0)

    # Primary smoke test at the spec-implied small shape (batch=2, seq=8, hidden=32).
    # Auto tiling folds both batch elements into one block: grid (1, 1).
    N, L, D = 2, 8, 32
    x = jax.random.normal(key, (N, L, D), dtype=jnp.float32)
    ref = _reference(x)
    out = jax.block_until_ready(sinusoidal_positional_encoding(x))
    assert out.shape == (N, L, D)
    assert out.dtype == x.dtype
    assert jnp.allclose(out, ref, atol=1e-5, rtol=1e-5), "mismatch vs reference"

    # Secondary check: tiled path (multiple L-tiles + partial last tile + PE
    # scratch reuse across the batch axis) at a lane-dense D.
    N2, L2, D2 = 2, 272, 128
    x2 = jax.random.normal(jax.random.PRNGKey(1), (N2, L2, D2), dtype=jnp.float32)
    ref2 = _reference(x2)
    out2 = jax.block_until_ready(
        sinusoidal_positional_encoding(x2, seq_tile=128, batch_block=1))
    # Slightly looser tolerance: cos is computed as sin(angle + pi/2).
    assert jnp.allclose(out2, ref2, atol=2e-4, rtol=1e-4), "mismatch vs reference (tiled)"

    # Third check: bf16 path (bf16 PE scratch + bf16 add), auto tiling.
    N3, L3, D3 = 2, 64, 128
    x3 = jax.random.normal(jax.random.PRNGKey(2), (N3, L3, D3), dtype=jnp.bfloat16)
    ref3 = _reference(x3)
    out3 = jax.block_until_ready(sinusoidal_positional_encoding(x3))
    assert out3.dtype == jnp.bfloat16
    assert jnp.allclose(out3.astype(jnp.float32), ref3.astype(jnp.float32),
                        atol=5e-2, rtol=5e-2), "mismatch vs reference (bf16)"

    print("KERNEL_OK")
</pallas_src>

<mosaic_0001>
module attributes {stable_mosaic.version = 11 : i64} {
  func.func @_pe_add_kernel(%arg0: i32, %arg1: i32, %arg2: memref<2x8x32xf32, #tpu.memory_space<vmem>>, %arg3: memref<2x8x32xf32, #tpu.memory_space<vmem>>, %arg4: memref<8x32xf32, #tpu.memory_space<vmem>>) attributes {dimension_semantics = [#tpu.dimension_semantics<parallel>, #tpu.dimension_semantics<arbitrary>], iteration_bounds = array<i64: 1, 1>, scalar_prefetch = 0 : i64, scratch_operands = 1 : i64, tpu.core_type = #tpu.core_type<tc>, window_params = [{transform_indices = @transform_0, window_bounds = array<i64: 2, 8, 32>}, {transform_indices = @transform_1, window_bounds = array<i64: 2, 8, 32>}]} {
    %c8_i32 = arith.constant 8 : i32
    %0 = arith.muli %arg0, %c8_i32 : i32
    %c0_i32 = arith.constant 0 : i32
    %1 = arith.cmpi eq, %arg1, %c0_i32 : i32
    %2 = arith.extui %1 : i1 to i32
    %c0_i32_0 = arith.constant 0 : i32
    %3 = arith.cmpi ne, %2, %c0_i32_0 : i32
    scf.if %3 {
      %10 = tpu.iota {dimensions = array<i32: 1>} : vector<1x32xi32>
      %c2_i32 = arith.constant 2 : i32
      %c0_i32_8 = arith.constant 0 : i32
      %11 = arith.cmpi eq, %c2_i32, %c0_i32_8 : i32
      %c1_i32 = arith.constant 1 : i32
      %12 = arith.select %11, %c1_i32, %c2_i32 : i32
      %13 = vector.broadcast %12 : i32 to vector<1x32xi32>
      %14 = arith.remsi %10, %13 : vector<1x32xi32>
      %c0_i32_9 = arith.constant 0 : i32
      %15 = vector.broadcast %c0_i32_9 : i32 to vector<1x32xi32>
      %16 = arith.cmpi ne, %14, %15 : vector<1x32xi32>
      %c0_i32_10 = arith.constant 0 : i32
      %17 = vector.broadcast %c0_i32_10 : i32 to vector<1x32xi32>
      %18 = arith.cmpi slt, %14, %17 : vector<1x32xi32>
      %c0_i32_11 = arith.constant 0 : i32
      %19 = arith.cmpi slt, %12, %c0_i32_11 : i32
      %20 = vector.broadcast %19 : i1 to vector<1x32xi1>
      %21 = vector.broadcast %20 : vector<1x32xi1> to vector<1x32xi1>
      %22 = arith.xori %18, %21 : vector<1x32xi1>
      %23 = arith.andi %22, %16 : vector<1x32xi1>
      %24 = vector.broadcast %12 : i32 to vector<1x32xi32>
      %25 = arith.addi %14, %24 : vector<1x32xi32>
      %26 = arith.select %23, %25, %14 : vector<1x32xi1>, vector<1x32xi32>
      %27 = arith.sitofp %26 : vector<1x32xi32> to vector<1x32xf32>
      %c2_i32_12 = arith.constant 2 : i32
      %c0_i32_13 = arith.constant 0 : i32
      %28 = arith.cmpi eq, %c2_i32_12, %c0_i32_13 : i32
      %c1_i32_14 = arith.constant 1 : i32
      %29 = arith.select %28, %c1_i32_14, %c2_i32_12 : i32
      %30 = vector.broadcast %29 : i32 to vector<1x32xi32>
      %31 = arith.remsi %10, %30 : vector<1x32xi32>
      %c0_i32_15 = arith.constant 0 : i32
      %32 = vector.broadcast %c0_i32_15 : i32 to vector<1x32xi32>
      %33 = arith.cmpi ne, %31, %32 : vector<1x32xi32>
      %c0_i32_16 = arith.constant 0 : i32
      %34 = vector.broadcast %c0_i32_16 : i32 to vector<1x32xi32>
      %35 = arith.cmpi slt, %31, %34 : vector<1x32xi32>
      %c0_i32_17 = arith.constant 0 : i32
      %36 = arith.cmpi slt, %29, %c0_i32_17 : i32
      %37 = vector.broadcast %36 : i1 to vector<1x32xi1>
      %38 = vector.broadcast %37 : vector<1x32xi1> to vector<1x32xi1>
      %39 = arith.xori %35, %38 : vector<1x32xi1>
      %40 = arith.andi %39, %33 : vector<1x32xi1>
      %41 = vector.broadcast %29 : i32 to vector<1x32xi32>
      %42 = arith.addi %31, %41 : vector<1x32xi32>
      %43 = arith.select %40, %42, %31 : vector<1x32xi1>, vector<1x32xi32>
      %44 = arith.subi %10, %43 : vector<1x32xi32>
      %45 = arith.sitofp %44 : vector<1x32xi32> to vector<1x32xf32>
      %cst = arith.constant -0.287823141 : f32
      %46 = vector.broadcast %cst : f32 to vector<1x32xf32>
      %47 = arith.mulf %45, %46 : vector<1x32xf32>
      %48 = math.exp %47 : vector<1x32xf32>
      %49 = tpu.iota {dimensions = array<i32: 0>} : vector<8x1xi32>
      %50 = vector.broadcast %0 : i32 to vector<8x1xi32>
      %51 = arith.addi %50, %49 : vector<8x1xi32>
      %52 = arith.sitofp %51 : vector<8x1xi32> to vector<8x1xf32>
      %53 = vector.broadcast %52 : vector<8x1xf32> to vector<8x32xf32>
      %54 = vector.broadcast %48 : vector<1x32xf32> to vector<8x32xf32>
      %55 = arith.mulf %53, %54 : vector<8x32xf32>
      %cst_18 = arith.constant 1.57079637 : f32
      %56 = vector.broadcast %cst_18 : f32 to vector<1x32xf32>
      %57 = arith.mulf %27, %56 : vector<1x32xf32>
      %58 = vector.broadcast %57 : vector<1x32xf32> to vector<8x32xf32>
      %59 = arith.addf %55, %58 : vector<8x32xf32>
      %60 = math.sin %59 : vector<8x32xf32>
      %c0_19 = arith.constant 0 : index
      %c0_20 = arith.constant 0 : index
      %61 = vector.load %arg4[%c0_19, %c0_20] : memref<8x32xf32, #tpu.memory_space<vmem>>, vector<8x32xf32>
      tpu.vector_store %arg4[%c0_19, %c0_20], %60 {strides = array<i32>} : memref<8x32xf32, #tpu.memory_space<vmem>>, vector<8x32xf32>,
    } else {
    }
    %c0 = arith.constant 0 : index
    %c0_1 = arith.constant 0 : index
    %c0_2 = arith.constant 0 : index
    %4 = vector.load %arg2[%c0, %c0_1, %c0_2] : memref<2x8x32xf32, #tpu.memory_space<vmem>>, vector<2x8x32xf32>
    %c0_3 = arith.constant 0 : index
    %c0_4 = arith.constant 0 : index
    %5 = vector.load %arg4[%c0_3, %c0_4] : memref<8x32xf32, #tpu.memory_space<vmem>>, vector<8x32xf32>
    %6 = vector.shape_cast %5 : vector<8x32xf32> to vector<1x8x32xf32>
    %7 = vector.broadcast %6 : vector<1x8x32xf32> to vector<2x8x32xf32>
    %8 = arith.addf %4, %7 : vector<2x8x32xf32>
    %c0_5 = arith.constant 0 : index
    %c0_6 = arith.constant 0 : index
    %c0_7 = arith.constant 0 : index
    %9 = vector.load %arg3[%c0_5, %c0_6, %c0_7] : memref<2x8x32xf32, #tpu.memory_space<vmem>>, vector<2x8x32xf32>
    tpu.vector_store %arg3[%c0_5, %c0_6, %c0_7], %8 {strides = array<i32>} : memref<2x8x32xf32, #tpu.memory_space<vmem>>, vector<2x8x32xf32>,
    return
  }
  func.func @transform_0(%arg0: i32, %arg1: i32) -> (i32, i32, i32) {
    %c0_i32 = arith.constant 0 : i32
    %c0_i32_0 = arith.constant 0 : i32
    return %arg1, %arg0, %c0_i32 : i32, i32, i32
  }
  func.func @transform_1(%arg0: i32, %arg1: i32) -> (i32, i32, i32) {
    %c0_i32 = arith.constant 0 : i32
    %c0_i32_0 = arith.constant 0 : i32
    return %arg1, %arg0, %c0_i32 : i32, i32, i32
  }
}

</mosaic_0001>

<llo_original>
// kernel: tpu_custom_call.1
$region0: #{tpu_custom_call.1}
  #allocation0 [shape = 'u32[]', space=smem, size = 0x4, offset = 0x4, fixed_abs, tag = 'smem constant byte address 0x4 - core index']
  #allocation1 [shape = 'u32[144,128]{1,0:T(1,128)}', space=vmem, size = 0x12000, scoped, tag = 'internal scratch']
  #allocation2 [shape = 'f32[8,32]{1,0:T(8,128)}', space=vmem, size = 0x1000, scoped, tag = 'scratch operand']
  %s0 = inlined_call_operand.hbm [shape: f32[2,8,32], index: 0, kind: input, shape index: {}, may-alias: {0,1}]
  %s1 = inlined_call_operand.hbm [shape: f32[2,8,32], index: 1, kind: output, shape index: {}, may-alias: {0,1}]
  %s2 = sld [smem:[#allocation0]]
  $region22: #{tpu_custom_call.1} parent=0
    _
  %s4 = ssub.s32 1, %s2
  %s5 = scalar_select 0, %s4, %s2
  $region1: #{tpu_custom_call.1} parent=0
    #allocation3 [shape = 'u8[8192]{0}', space=vmem, size = 0x2000, scoped, tag = 'input window, operand 0, single buffered']
    #allocation4 [shape = 's32[1]{0}', space=sflag, size = 0x4, scoped, tag = 'scoped memory for tpu_custom_call.1']
    #allocation5 [shape = 's32[1]{0}', space=sflag, size = 0x4, scoped, tag = 'scoped memory for tpu_custom_call.1']
    #allocation6 [shape = 'u8[8192]{0}', space=vmem, size = 0x2000, scoped, tag = 'output window, operand 0, single buffered']
    %6 = vsyncpa [#allocation4], 0
    %7 = vsyncpa [#allocation5], 0
    // Predicated region
    $region2: #{tpu_custom_call.1} parent=1 // pred_check
      _
    $region3: #{tpu_custom_call.1} parent=1 // pred_check_branch
      %9 = sbr.rel (0) target = $region5
    $region4: #{tpu_custom_call.1} parent=1 // pred_region
      %s11 = ssub.s32 256, 256
      %12 = vsyncadd [#allocation4], %s11
      %s13 = sshll.u32 [#allocation3], 4
      %s14 = int_to_ptr.vmem [resolvable:$true] %s13
      %19 = dma.hbm_to_vmem [thread:$0]  %s0, 256, %s14, [#allocation4], 128, 128, 8
    $region5: #{tpu_custom_call.1} parent=1 // pred_fallthru
      _
    // Predicated region
    $region6: #{tpu_custom_call.1} parent=1 // pred_check
      _
    $region7: #{tpu_custom_call.1} parent=1 // pred_check_branch
      %21 = sbr.rel (0) target = $region9
    $region8: #{tpu_custom_call.1} parent=1 // pred_region
      %22 = dma.done [#allocation4], 256
    $region9: #{tpu_custom_call.1} parent=1 // pred_fallthru
      _
    %s23 = smul.u32 0, 8
    %p24 = scmp.eq.s32.totalorder 0, 0
    // Predicated region
    $region10: #{tpu_custom_call.1} parent=1 // pred_check
      %p25 = pneg %p24
    $region11: #{tpu_custom_call.1} parent=1 // pred_check_branch
      %27 = sbr.rel (%p25) target = $region13
    $region12: #{tpu_custom_call.1} parent=1 // pred_region
      %v28 = vlaneseq
      %v29 = vand.u32 %v28, 127
      %vm30 = vcmp.lt.s32.totalorder %v29, 0
      %v31 = vsub.s32 0, %v29
      %v32 = vsel %vm30, %v31, %v29
      %v33 = vshrl.u32 %v32, 1
      %v34 = vand.u32 %v32, 1
      %v35 = vsub.s32 0, %v34
      %v36 = vsel %vm30, %v35, %v34
      %vm37 = vcmp.ne.s32.totalorder %v36, 0
      %vm38 = vcmp.lt.s32.totalorder %v36, 0
      %vm39 = vmand %vm38, %vm37
      %v40 = vadd.s32 %v36, 2
      %v41 = vsel %vm39, %v40, %v36
      %v42 = vcvt.s32.f32 %v41
      %v43 = vsub.s32 %v29, %v41
      %v44 = vcvt.s32.f32 %v43
      %v45 = vmul.f32 %v44, -0.28782314
      %v46 = vmul.f32 %v45, 1.442695
      %v47 = vpow.pop %v46
      %v48 = vlaneseq
      %v49 = vshrl.u32 %v48, 7
      %v50 = vstv %s23
      %v51 = vadd.s32 %v50, %v49
      %v52 = vcvt.s32.f32 %v51
      %v53 = vmul.f32 %v52, %v47
      %v54 = vmul.f32 %v42, 1.5707964
      %v55 = vadd.f32 %v53, %v54
      %v56 = vand.u32 2147483647, %v55
      %vm57 = vcmp.le.f32.partialorder %v56, 0.7853982
      %vm58 = vcmp.lt.s32.totalorder %v55, 0
      %v59 = vand.u32 %v55, 2139095040
      %v60 = vshrl.u32 %v59, 23
      %v61 = vsub.s32 %v60, 127
      %v62 = vand.u32 2147483647, %v55
      %v63 = vand.u32 %v62, 8388607
      %v64 = vor.u32 %v63, 8388608
      %v65 = vsub.s32 0, %v64
      %v66 = vadd.s32 %v61, 1
      %vm67 = vcmp.gt.s32.totalorder %v66, 0
      %v68 = vsel %vm67, %v66, 0
      %v69 = vshrl.u32 %v68, 5
      %v70 = vand.u32 %v68, 31
      %v71 = vsub.s32 32, %v70
      %v72 = vshrl.u32 683565275, %v71
      %v73 = vshll.u32 683565275, %v70
      %v74 = vshrl.u32 2475754826, %v71
      %v75 = vor.u32 %v73, %v74
      %v76 = vshll.u32 2475754826, %v70
      %v77 = vshrl.u32 2131351028, %v71
      %v78 = vor.u32 %v76, %v77
      %v79 = vshll.u32 2131351028, %v70
      %v80 = vshrl.u32 2102212464, %v71
      %v81 = vor.u32 %v79, %v80
      %v82 = vshll.u32 2102212464, %v70
      %v83 = vshrl.u32 920167782, %v71
      %v84 = vor.u32 %v82, %v83
      %v85 = vshll.u32 920167782, %v70
      %v86 = vshrl.u32 1326507024, %v71
      %v87 = vor.u32 %v85, %v86
      %vm88 = vcmp.lt.s32.totalorder %v69, 1
      %vm89 = vcmp.lt.s32.totalorder %v69, 2
      %vm90 = vcmp.lt.s32.totalorder %v69, 3
      %vm91 = vcmp.lt.s32.totalorder %v69, 4
      %v92 = vsel %vm88, %v72, %v75
      %v93 = vsel %vm91, %v81, 2102212464
      %v94 = vsel %vm90, %v78, %v93
      %v95 = vsel %vm89, %v92, %v94
      %v96 = vsel %vm88, %v75, %v78
      %v97 = vsel %vm91, %v84, 920167782
      %v98 = vsel %vm90, %v81, %v97
      %v99 = vsel %vm89, %v96, %v98
      %v100 = vsel %vm88, %v78, %v81
      %v101 = vsel %vm91, %v87, 1326507024
      %v102 = vsel %vm90, %v84, %v101
      %v103 = vsel %vm89, %v100, %v102
      %v104 = vshll.u32 %v64, 8
      %v105 = vmul.u32.u64.compose %v104, %v103
      %v106 = vextract.low.u32 %v105
      %v107 = vextract.high.u32 %v105
      %v108 = vmul.u32.u64.compose %v104, %v99
      %v109 = vextract.low.u32 %v108
      %v110 = vextract.high.u32 %v108
      %v111 = vmul.u32 %v104, %v95
      %v112 = vadd.s32 %v107, %v109
      %vm113 = vc.u32 %v107, %v109
      %v114 = vadd.s32 %v110, 1
      %v115 = vsel %vm113, %v114, %v110
      %v116 = vadd.s32 %v111, %v115
      %v117 = vadd.s32 %v116, 536870912
      %v118 = vshrl.u32 %v117, 30
      %v119 = vshll.u32 %v118, 30
      %v120 = vsub.s32 %v116, %v119
      %vm121 = vcmp.lt.s32.totalorder %v120, 0
      %v122 = vsub.s32 0, %v120
      %v123 = vsel %vm121, %v122, %v120
      %v124 = vclz %v123
      %v125 = vsub.s32 %v124, 2
      %vm126 = vcmp.gt.s32.totalorder 0, %v125
      %v127 = vsel %vm126, 0, %v125
      %v128 = vsub.s32 32, %v127
      %v129 = vshll.u32 %v120, %v127
      %v130 = vshrl.u32 %v112, %v128
      %v131 = vor.u32 %v129, %v130
      %v132 = vsub.s32 4294967266, %v127
      %v133 = vadd.s32 %v132, 127
      %v134 = vshll.u32 %v133, 23
      %v135 = vor.u32 4788187, %v134
      %v136 = vand.u32 2147483647, %v135
      %v138 = vcvt.s32.f32 %v131
      %v139 = vmul.f32 %v138, %v136
      %v140 = vxor.u32 %v139, 2147483648
      %v141 = vsel %vm58, %v140, %v139
      %v142 = vsub.s32 4, %v118
      %v143 = vsel %vm58, %v142, %v118
      %v144 = vsel %vm57, %v55, %v141
      %v145 = vsel %vm57, 0, %v143
      %v146 = vcosq.f32.pop %v144
      %v147 = vsinq.f32.pop %v144
      %vm148 = vweird.f32 %v55
      %v149 = vadd.s32 %v145, 3
      %v150 = vand.u32 %v149, 3
      %vm151 = vcmp.lt.s32.totalorder %v150, 2
      %vm152 = vcmp.eq.s32.totalorder %v150, 0
      %v153 = vxor.u32 %v147, 2147483648
      %v154 = vsel %vm152, %v146, %v153
      %vm155 = vcmp.eq.s32.totalorder %v150, 2
      %v156 = vxor.u32 %v146, 2147483648
      %v157 = vsel %vm155, %v156, %v147
      %v158 = vsel %vm151, %v154, %v157
      %v159 = vsel %vm148, nan, %v158
      %vm160 = vcmask 261120
      %161 = vst.msk [vmem:[#allocation2] sm:$0xff] %vm160, %v159
    $region13: #{tpu_custom_call.1} parent=1 // pred_fallthru
      _
    %v162 = vld [vmem:[#allocation3] sm:$0xff]
    %v163 = vld [vmem:[#allocation3 + $0x8] sm:$0xff]
    %v164 = vld [vmem:[#allocation2] sm:$0xff]
    %v165 = vadd.f32 %v162, %v164
    %v166 = vadd.f32 %v163, %v164
    %vm167 = vcmask 261120
    %168 = vst.msk [vmem:[#allocation6] sm:$0xff] %vm167, %v165
    %169 = vst.msk [vmem:[#allocation6 + $0x8] sm:$0xff] %vm167, %v166
    // Predicated region
    $region14: #{tpu_custom_call.1} parent=1 // pred_check
      _
    $region15: #{tpu_custom_call.1} parent=1 // pred_check_branch
      %171 = sbr.rel (0) target = $region17
    $region16: #{tpu_custom_call.1} parent=1 // pred_region
      %s173 = ssub.s32 256, 256
      %174 = vsyncadd [#allocation5], %s173
      %s175 = sshll.u32 [#allocation6], 4
      %s176 = int_to_ptr.vmem [resolvable:$true] %s175
      %181 = dma.vmem_to_hbm [thread:$0]  %s176, 256, %s1, [#allocation5], 128, 128, 8
    $region17: #{tpu_custom_call.1} parent=1 // pred_fallthru
      _
    // Predicated region
    $region18: #{tpu_custom_call.1} parent=1 // pred_check
      _
    $region19: #{tpu_custom_call.1} parent=1 // pred_check_branch
      %183 = sbr.rel (0) target = $region21
    $region20: #{tpu_custom_call.1} parent=1 // pred_region
      %184 = dma.done [#allocation5], 256
    $region21: #{tpu_custom_call.1} parent=1 // pred_fallthru
      _
    %185 = vsyncpa [#allocation4], 1
    %186 = vsyncpa [#allocation5], 1

</llo_original>
